<compile_context>
chip_gen: v5e
topology: v5e:2x2
jax: 0.10.0
libtpu: 0.0.40
codegen_flags: <defaults>
</compile_context>

<pallas_src>
import jax
import jax.numpy as jnp
from jax import lax
from jax.experimental import pallas as pl
from jax.experimental.pallas import tpu as pltpu  # noqa: F401  (TPU backend import)

PRED_LEN = 12  # fixed prediction horizon from the PyTorch module (`repeat(12, 1, 1)`)


def cvm_kernel(obs_ref, w_ref, b_ref, o_ref):
    """Constant-velocity delta -> single-row linear -> broadcast to 12 rows.

    obs_ref: (2, K)        last two flattened observation rows (VMEM)
    w_ref:   (O, K)        linear weight, native PyTorch layout (no transpose)
    b_ref:   (1, O)        linear bias
    o_ref:   (PRED_LEN, O) output
    """
    # last relative displacement: observed[-1] - observed[-2], kept 2-D as (1, K)
    delta = obs_ref[pl.ds(1, 1), :] - obs_ref[pl.ds(0, 1), :]            # (1, K)
    # Linear on the single delta row: (1, K) x (O, K) contracting on K -> (1, O).
    y = lax.dot_general(
        delta,
        w_ref[...],
        dimension_numbers=(((1,), (1,)), ((), ())),
        preferred_element_type=jnp.float32,
    ) + b_ref[...]                                                        # (1, O)
    # repeat(12,1,1) of identical rows == cheap sublane broadcast of the result.
    o_ref[...] = jnp.broadcast_to(y, o_ref.shape)


def constant_velocity_forward(observed, weight, bias):
    """observed: (T, N, D); weight: (O, K) PyTorch layout; bias: (O,)."""
    T, N, D = observed.shape
    K = N * D
    O = weight.shape[0]
    assert weight.shape == (O, K)
    assert T >= 2

    # Only the last two timesteps are needed by the model; don't DMA the rest.
    obs_last2 = observed[T - 2:T].reshape(2, K).astype(jnp.float32)   # (2, K)
    w = weight.astype(jnp.float32)                                    # (O, K), no transpose
    b2 = bias.reshape(1, O).astype(jnp.float32)                       # (1, O)

    cost = pl.CostEstimate(
        flops=2 * K * O,
        transcendentals=0,
        bytes_accessed=(2 * K + O * K + O + PRED_LEN * O) * 4,
    )

    out = pl.pallas_call(
        cvm_kernel,
        out_shape=jax.ShapeDtypeStruct((PRED_LEN, O), jnp.float32),
        in_specs=[
            pl.BlockSpec((2, K), lambda: (0, 0)),
            pl.BlockSpec((O, K), lambda: (0, 0)),
            pl.BlockSpec((1, O), lambda: (0, 0)),
        ],
        out_specs=pl.BlockSpec((PRED_LEN, O), lambda: (0, 0)),
        cost_estimate=cost,
    )(obs_last2, w, b2)
    return out
    # TODO(synk): if this op is ever called per-sequence in a batch, add a leading
    # "parallel" batch grid axis with a resident (constant index_map) weight block
    # so both v7x TensorCores are used and the weight DMA is amortized.


if __name__ == "__main__":
    # Small shapes consistent with the module:
    #   observed: (T=8 timesteps, N=2 agents, D=16 features) -> input_size = N*D = 32
    #   output_size = 32
    T, N, D = 8, 2, 16
    input_size = N * D
    output_size = 32

    key = jax.random.PRNGKey(0)
    k_obs, k_w, k_b = jax.random.split(key, 3)

    observed = jax.random.normal(k_obs, (T, N, D), dtype=jnp.float32)

    # Deterministic PyTorch-style Linear init: U(-1/sqrt(in), 1/sqrt(in))
    bound = 1.0 / jnp.sqrt(jnp.float32(input_size))
    weight = jax.random.uniform(
        k_w, (output_size, input_size), minval=-bound, maxval=bound, dtype=jnp.float32
    )
    bias = jax.random.uniform(
        k_b, (output_size,), minval=-bound, maxval=bound, dtype=jnp.float32
    )

    out = constant_velocity_forward(observed, weight, bias)
    out = jax.block_until_ready(out)

    # Pure-JAX reference check of the forward semantics.
    delta = (observed[-1] - observed[-2]).reshape(-1)                  # (K,)
    x_ref = jnp.broadcast_to(delta[None, :], (PRED_LEN, input_size))
    ref = x_ref @ weight.T + bias
    assert out.shape == (PRED_LEN, output_size)
    assert jnp.allclose(out, ref, atol=1e-5, rtol=1e-5)

    print("KERNEL_OK")
</pallas_src>

<mosaic_0001>
module attributes {stable_mosaic.version = 11 : i64} {
  func.func @cvm_kernel(%arg0: memref<2x32xf32, #tpu.memory_space<vmem>>, %arg1: memref<32x32xf32, #tpu.memory_space<vmem>>, %arg2: memref<1x32xf32, #tpu.memory_space<vmem>>, %arg3: memref<12x32xf32, #tpu.memory_space<vmem>>) attributes {dimension_semantics = [], scalar_prefetch = 0 : i64, scratch_operands = 0 : i64, tpu.core_type = #tpu.core_type<tc>} {
    %c1 = arith.constant 1 : index
    %c0 = arith.constant 0 : index
    %0 = vector.load %arg0[%c1, %c0] : memref<2x32xf32, #tpu.memory_space<vmem>>, vector<1x32xf32>
    %c0_0 = arith.constant 0 : index
    %c0_1 = arith.constant 0 : index
    %1 = vector.load %arg0[%c0_0, %c0_1] : memref<2x32xf32, #tpu.memory_space<vmem>>, vector<1x32xf32>
    %2 = arith.subf %0, %1 : vector<1x32xf32>
    %c0_2 = arith.constant 0 : index
    %c0_3 = arith.constant 0 : index
    %3 = vector.load %arg1[%c0_2, %c0_3] : memref<32x32xf32, #tpu.memory_space<vmem>>, vector<32x32xf32>
    %cst = arith.constant dense<0.000000e+00> : vector<1x32xf32>
    %4 = tpu.matmul %2, %3, %cst {dimension_numbers = #tpu.dot_dimension_numbers<[1], [1], [0], [0], [0, 0, 1, 0], [], []>} : vector<1x32xf32>, vector<32x32xf32>, vector<1x32xf32> -> vector<1x32xf32>
    %c0_4 = arith.constant 0 : index
    %c0_5 = arith.constant 0 : index
    %5 = vector.load %arg2[%c0_4, %c0_5] : memref<1x32xf32, #tpu.memory_space<vmem>>, vector<1x32xf32>
    %6 = arith.addf %4, %5 : vector<1x32xf32>
    %7 = vector.shape_cast %6 : vector<1x32xf32> to vector<1x32xf32>
    %8 = vector.broadcast %7 : vector<1x32xf32> to vector<12x32xf32>
    %c0_6 = arith.constant 0 : index
    %c0_7 = arith.constant 0 : index
    %9 = vector.load %arg3[%c0_6, %c0_7] : memref<12x32xf32, #tpu.memory_space<vmem>>, vector<12x32xf32>
    tpu.vector_store %arg3[%c0_6, %c0_7], %8 {strides = array<i32>} : memref<12x32xf32, #tpu.memory_space<vmem>>, vector<12x32xf32>,
    return
  }
}

</mosaic_0001>

<llo_original>
// kernel: tpu_custom_call.1
$region0: #{tpu_custom_call.1}
  #allocation0 [shape = 'u32[]', space=smem, size = 0x4, offset = 0x4, fixed_abs, tag = 'smem constant byte address 0x4 - core index']
  #allocation1 [shape = 'u32[72,128]{1,0:T(1,128)}', space=vmem, size = 0x9000, scoped, tag = 'internal scratch']
  %s0 = inlined_call_operand.hbm [shape: f32[2,32], index: 0, kind: input, shape index: {}]
  %s1 = inlined_call_operand.hbm [shape: f32[32,32], index: 1, kind: input, shape index: {}]
  %s2 = inlined_call_operand.vmem [shape: f32[1,32], index: 2, kind: input, shape index: {}]
  %s3 = inlined_call_operand.hbm [shape: f32[12,32], index: 3, kind: output, shape index: {}]
  %s4 = sld [smem:[#allocation0]]
  $region30: #{tpu_custom_call.1} parent=0
    _
  %s6 = ssub.s32 1, %s4
  %s7 = scalar_select 0, %s6, %s4
  $region1: #{tpu_custom_call.1} parent=0
    #allocation2 [shape = 'u8[1024]{0}', space=vmem, size = 0x400, scoped, tag = 'input window, operand 0, single buffered']
    #allocation3 [shape = 's32[1]{0}', space=sflag, size = 0x4, scoped, tag = 'scoped memory for tpu_custom_call.1']
    #allocation4 [shape = 's32[1]{0}', space=sflag, size = 0x4, scoped, tag = 'scoped memory for tpu_custom_call.1']
    #allocation5 [shape = 'u8[16384]{0}', space=vmem, size = 0x4000, scoped, tag = 'input window, operand 1, single buffered']
    #allocation6 [shape = 's32[1]{0}', space=sflag, size = 0x4, scoped, tag = 'scoped memory for tpu_custom_call.1']
    #allocation7 [shape = 'u8[8192]{0}', space=vmem, size = 0x2000, scoped, tag = 'output window, operand 0, single buffered']
    %8 = vsyncpa [#allocation3], 0
    %9 = vsyncpa [#allocation6], 0
    %10 = vsyncpa [#allocation4], 0
    // Predicated region
    $region2: #{tpu_custom_call.1} parent=1 // pred_check
      _
    $region3: #{tpu_custom_call.1} parent=1 // pred_check_branch
      %12 = sbr.rel (0) target = $region5
    $region4: #{tpu_custom_call.1} parent=1 // pred_region
      %14 = vsyncadd [#allocation3], 0
      %s16 = sshll.u32 %s0, 4
      %s17 = int_to_ptr.hbm [resolvable:$true] %s16
      %s18 = sshll.u32 [#allocation2], 4
      %s19 = int_to_ptr.vmem [resolvable:$true] %s18
      %21 = dma.hbm_to_vmem [thread:$0]  %s17, 32, %s19, [#allocation3]
    $region5: #{tpu_custom_call.1} parent=1 // pred_fallthru
      _
    // Predicated region
    $region6: #{tpu_custom_call.1} parent=1 // pred_check
      _
    $region7: #{tpu_custom_call.1} parent=1 // pred_check_branch
      %23 = sbr.rel (0) target = $region9
    $region8: #{tpu_custom_call.1} parent=1 // pred_region
      %25 = vsyncadd [#allocation6], 0
      %s26 = sshll.u32 %s1, 4
      %s27 = int_to_ptr.hbm [resolvable:$true] %s26
      %s28 = sshll.u32 [#allocation5], 4
      %s29 = int_to_ptr.vmem [resolvable:$true] %s28
      %34 = dma.hbm_to_vmem [thread:$0]  %s27, 512, %s29, [#allocation6], 128, 128, 8
    $region9: #{tpu_custom_call.1} parent=1 // pred_fallthru
      _
    // Predicated region
    $region10: #{tpu_custom_call.1} parent=1 // pred_check
      _
    $region11: #{tpu_custom_call.1} parent=1 // pred_check_branch
      %36 = sbr.rel (0) target = $region13
    $region12: #{tpu_custom_call.1} parent=1 // pred_region
      _
    $region13: #{tpu_custom_call.1} parent=1 // pred_fallthru
      _
    // Predicated region
    $region14: #{tpu_custom_call.1} parent=1 // pred_check
      _
    $region15: #{tpu_custom_call.1} parent=1 // pred_check_branch
      %38 = sbr.rel (0) target = $region17
    $region16: #{tpu_custom_call.1} parent=1 // pred_region
      %40 = dma.done [#allocation3], 32
    $region17: #{tpu_custom_call.1} parent=1 // pred_fallthru
      _
    // Predicated region
    $region18: #{tpu_custom_call.1} parent=1 // pred_check
      _
    $region19: #{tpu_custom_call.1} parent=1 // pred_check_branch
      %42 = sbr.rel (0) target = $region21
    $region20: #{tpu_custom_call.1} parent=1 // pred_region
      %44 = dma.done [#allocation6], 512
    $region21: #{tpu_custom_call.1} parent=1 // pred_fallthru
      _
    %v45 = vld [vmem:[#allocation2 + $0x1] sm:$0x1]
    %v46 = vld [vmem:[#allocation2] sm:$0x1]
    %v47 = vsub.f32 %v45, %v46
    %v48 = vld [vmem:[#allocation5] sm:$0xff]
    %v49 = vld [vmem:[#allocation5 + $0x8] sm:$0xff]
    %v50 = vld [vmem:[#allocation5 + $0x10] sm:$0xff]
    %v51 = vld [vmem:[#allocation5 + $0x18] sm:$0xff]
    %v52 = vld [vmem:[%s2] sm:$0x1]
    %vm53 = vcmask 261120
    %v55 = vsel %vm53, %v47, 0
    %v58 = vsel %vm53, %v48, 0
    %v61 = vsel %vm53, %v49, 0
    %v64 = vsel %vm53, %v50, 0
    %v67 = vsel %vm53, %v51, 0
    %69 = vmatpush.xpose.msra.mxu0 0.0
    %70 = vmatpush.xpose.msra.mxu0 0.0
    %71 = vmatpush.xpose.msra.mxu0 0.0
    %72 = vmatpush.xpose.msra.mxu0 0.0
    %73 = vmatpush.xpose.msra.mxu0 0.0
    %74 = vmatpush.xpose.msra.mxu0 0.0
    %75 = vmatpush.xpose.msra.mxu0 0.0
    %76 = vmatpush.xpose.msra.mxu0 0.0
    %77 = vmatpush.xpose.msra.mxu0 0.0
    %78 = vmatpush.xpose.msra.mxu0 0.0
    %79 = vmatpush.xpose.msra.mxu0 0.0
    %80 = vmatpush.xpose.msra.mxu0 0.0
    %81 = vmatpush.xpose.msra.mxu0 %v67
    %82 = vmatpush.xpose.msra.mxu0 %v64
    %83 = vmatpush.xpose.msra.mxu0 %v61
    %84 = vmatpush.xpose.msra.mxu0 %v58
    %85 = vmatmul.f32.gmra.mxu0 %v55
    %v86 = vpop.f32.mrf.mxu0
    %v87 = vadd.f32 %v52, %v86
    %88 = vdwg.mxu0
    %v89 = vperm.slane %v87, 0
    %90 = vst.msk [vmem:[#allocation7] sm:$0xff] %vm53, %v89
    %vm91 = vcmask 257024
    %92 = vst.msk [vmem:[#allocation7 + $0x8] sm:$0xf] %vm91, %v89
    // Predicated region
    $region22: #{tpu_custom_call.1} parent=1 // pred_check
      _
    $region23: #{tpu_custom_call.1} parent=1 // pred_check_branch
      %94 = sbr.rel (0) target = $region25
    $region24: #{tpu_custom_call.1} parent=1 // pred_region
      %96 = vsyncadd [#allocation4], 0
      %s97 = sshll.u32 [#allocation7], 4
      %s98 = int_to_ptr.vmem [resolvable:$true] %s97
      %s99 = sshll.u32 %s3, 4
      %s100 = int_to_ptr.hbm [resolvable:$true] %s99
      %105 = dma.vmem_to_hbm [thread:$0]  %s98, 256, %s100, [#allocation4], 128, 128, 8
    $region25: #{tpu_custom_call.1} parent=1 // pred_fallthru
      _
    // Predicated region
    $region26: #{tpu_custom_call.1} parent=1 // pred_check
      _
    $region27: #{tpu_custom_call.1} parent=1 // pred_check_branch
      %107 = sbr.rel (0) target = $region29
    $region28: #{tpu_custom_call.1} parent=1 // pred_region
      %109 = dma.done [#allocation4], 256
    $region29: #{tpu_custom_call.1} parent=1 // pred_fallthru
      _
    %110 = vsyncpa [#allocation3], 1
    %111 = vsyncpa [#allocation6], 1
    %112 = vsyncpa [#allocation4], 1

</llo_original>
